<compile_context>
chip_gen: v7x
topology: tpu7x:2x2x1
jax: 0.10.0
libtpu: 0.0.40
codegen_flags: <defaults>
</compile_context>

<pallas_src>
import jax
import jax.numpy as jnp
from jax.experimental import pallas as pl
from jax.experimental.pallas import tpu as pltpu


# ----------------------------------------------------------------------------
# Kernel: one batch tile per grid step.
# ----------------------------------------------------------------------------
def two_tower_kernel(slab_ref, w_ref, out_ref):
    # slab_ref : (F_pad, TB)  bf16 packed features, batch on the lane axis
    # w_ref    : (2H, F_pad)  bf16 stacked [user-tower ; item-tower] weights
    # out_ref  : (1, TB)      f32 lane-dense per-example scores
    h2 = w_ref.shape[0]
    h = h2 // 2
    # Single MXU matmul per tile: rows 0:H are the user-tower embedding,
    # rows H:2H are the item-tower embedding (biases ride the ones-row).
    emb = jnp.dot(w_ref[...], slab_ref[...],
                  preferred_element_type=jnp.float32)          # (2H, TB) f32
    # Per-example dot product = sublane reduce -> lane-dense (1, TB).
    out_ref[...] = jnp.sum(emb[0:h, :] * emb[h:h2, :], axis=0, keepdims=True)


# ----------------------------------------------------------------------------
# Weight packing: both Linear layers + both biases into one (2H, F) bf16
# matrix.  Slab row order: [user(E), item(E), brand(E), desc_mean(D),
# price(1), ones(1)] -> F = 3E + D + 2.
# ----------------------------------------------------------------------------
def pack_weights(params):
    wu, bu = params["wu"], params["bu"]            # (E, H), (1, H)
    wi, bi = params["wi"], params["bi"]            # (2E+D+1, H), (1, H)
    E, H = wu.shape
    Fi = wi.shape[0]                               # 2E + D + 1 (item,brand,desc,price)

    # user-tower rows: only the user columns + bias (ones) column are nonzero
    w_user = jnp.concatenate(
        [wu.T, jnp.zeros((H, Fi), jnp.float32), bu.T], axis=1)
    # item-tower rows: wi rows already ordered [item, brand, desc, price]
    # to match the torch.cat order, so wi.T drops straight in.
    w_item = jnp.concatenate(
        [jnp.zeros((H, E), jnp.float32), wi.T, bi.T], axis=1)

    w_big = jnp.concatenate([w_user, w_item], axis=0)          # (2H, F)

    # Pad contraction dim to a multiple of 8 sublanes ONLY (padding to 128
    # would add junk rows to every memory-bound slab tile).
    F = w_big.shape[1]
    F_pad = ((F + 7) // 8) * 8
    if F_pad != F:
        w_big = jnp.pad(w_big, ((0, 0), (0, F_pad - F)))
    return w_big.astype(jnp.bfloat16)


# ----------------------------------------------------------------------------
# Feature packing: gathers (plain JAX), description mean fused with the
# gather, slab built directly in transposed (F, B) layout, cast to bf16.
# ----------------------------------------------------------------------------
def build_slab(params, user, item, brand, price, description, f_pad):
    B = user.shape[0]

    user_t = jnp.take(params["user_table"], user, axis=0).T           # (E, B)
    item_t = jnp.take(params["item_table"], item, axis=0).T           # (E, B)
    brand_t = jnp.take(params["brand_table"], brand, axis=0).T        # (E, B)
    # mean over L tokens done here (not folded into the weights)
    desc_t = jnp.take(params["desc_table"], description, axis=0) \
                .mean(axis=1).T                                        # (D, B)

    slab = jnp.concatenate(
        [user_t, item_t, brand_t, desc_t,
         price.astype(jnp.float32).reshape(1, B),
         jnp.ones((1, B), jnp.float32)],                               # bias row
        axis=0)                                                        # (F, B)

    F = slab.shape[0]
    if f_pad != F:
        slab = jnp.pad(slab, ((0, f_pad - F), (0, 0)))
    return slab.astype(jnp.bfloat16)


# ----------------------------------------------------------------------------
# Forward
# ----------------------------------------------------------------------------
def two_tower_forward(params, user, item, brand, price, description, *, tb=4096):
    B = user.shape[0]
    H = params["wu"].shape[1]

    w_big = pack_weights(params)                       # (2H, F_pad) bf16
    F_pad = w_big.shape[1]
    slab = build_slab(params, user, item, brand, price, description, F_pad)

    # Tile selection: big tiles (multi-100KB..MB DMAs) amortize per-step
    # overhead; cap so the parallel batch axis keeps >= 2 grid steps whenever
    # the batch allows (feeds both v7x TensorCores).  TB=4096 bf16 tile is
    # ~0.6 MB, trivially inside v7x's 32 MiB scoped VMEM with double buffering.
    half = ((((B + 1) // 2) + 127) // 128) * 128       # round_up(ceil(B/2), 128)
    TB = max(128, min(tb, half))
    B_pad = pl.cdiv(B, TB) * TB
    if B_pad != B:
        slab = jnp.pad(slab, ((0, 0), (0, B_pad - B)))

    grid = (B_pad // TB,)

    out = pl.pallas_call(
        two_tower_kernel,
        out_shape=jax.ShapeDtypeStruct((1, B_pad), jnp.float32),
        grid_spec=pltpu.PrefetchScalarGridSpec(
            num_scalar_prefetch=0,
            grid=grid,
            in_specs=[
                # per-step batch tile of the packed features
                pl.BlockSpec((F_pad, TB), lambda i: (0, i)),
                # stacked weights: constant index_map -> resident in VMEM
                pl.BlockSpec((2 * H, F_pad), lambda i: (0, 0)),
            ],
            out_specs=pl.BlockSpec((1, TB), lambda i: (0, i)),
        ),
        compiler_params=pltpu.CompilerParams(
            dimension_semantics=("parallel",),     # shard batch across v7x TCs
            vmem_limit_bytes=32 * 1024 * 1024,
        ),
    )(slab, w_big)

    return out.reshape(-1)[:B]                         # matches PyTorch (B,)


# ----------------------------------------------------------------------------
# Parameter init (nn.Embedding ~ N(0,1); Linear weights scaled down)
# ----------------------------------------------------------------------------
def init_params(key, user_dim, item_dim, brand_dim, vocab_size,
                embedding_dim, description_embedding_size, hidden=64):
    ks = jax.random.split(key, 8)
    E, D = embedding_dim, description_embedding_size
    Fi = 2 * E + D + 1
    return {
        "user_table": jax.random.normal(ks[0], (user_dim, E), jnp.float32),
        "item_table": jax.random.normal(ks[1], (item_dim, E), jnp.float32),
        "brand_table": jax.random.normal(ks[2], (brand_dim, E), jnp.float32),
        "desc_table": jax.random.normal(ks[3], (vocab_size, D), jnp.float32),
        # user tower Linear(E, 64): stored transposed (E, 64)
        "wu": jax.random.normal(ks[4], (E, hidden), jnp.float32) * 0.1,
        "bu": jax.random.normal(ks[5], (1, hidden), jnp.float32) * 0.1,
        # item tower Linear(2E + D + 1, 64): stored transposed, rows ordered
        # [item(E), brand(E), desc(D), price(1)] to match torch.cat order.
        "wi": jax.random.normal(ks[6], (Fi, hidden), jnp.float32) * 0.1,
        "bi": jax.random.normal(ks[7], (1, hidden), jnp.float32) * 0.1,
    }


if __name__ == "__main__":
    # small, forward-consistent shapes
    USER_DIM, ITEM_DIM, BRAND_DIM, VOCAB = 10, 12, 6, 20
    EMB, DESC_EMB = 16, 16
    B, L = 8, 8

    key = jax.random.PRNGKey(0)
    kp, ku, ki, kb, kpr, kd = jax.random.split(key, 6)

    params = init_params(kp, USER_DIM, ITEM_DIM, BRAND_DIM, VOCAB, EMB, DESC_EMB)

    user = jax.random.randint(ku, (B,), 0, USER_DIM)
    item = jax.random.randint(ki, (B,), 0, ITEM_DIM)
    brand = jax.random.randint(kb, (B,), 0, BRAND_DIM)
    price = jax.random.uniform(kpr, (B,), jnp.float32)
    description = jax.random.randint(kd, (B, L), 0, VOCAB)

    fwd = jax.jit(two_tower_forward, static_argnames=("tb",))
    out = fwd(params, user, item, brand, price, description)
    jax.block_until_ready(out)

    # pure-JAX f32 reference (same math as the PyTorch forward)
    uvec = params["user_table"][user]
    uemb = uvec @ params["wu"] + params["bu"]
    dmean = params["desc_table"][description].mean(axis=1)
    x = jnp.concatenate(
        [params["item_table"][item], params["brand_table"][brand],
         dmean, price[:, None]], axis=1)
    iemb = x @ params["wi"] + params["bi"]
    ref = (uemb * iemb).sum(axis=1)

    assert out.shape == (B,)
    # bf16 feature/weight storage -> relaxed (relative-to-max) tolerance
    err = float(jnp.max(jnp.abs(out - ref)))
    scale = float(jnp.max(jnp.abs(ref))) + 1e-6
    assert err <= 0.08 * scale, (err, scale, out, ref)

    print("KERNEL_OK")
</pallas_src>

<mosaic_0001>
module attributes {stable_mosaic.version = 11 : i64} {
  func.func @two_tower_kernel(%arg0: i32, %arg1: memref<72x128xbf16, #tpu.memory_space<vmem>>, %arg2: memref<128x72xbf16, #tpu.memory_space<vmem>>, %arg3: memref<1x128xf32, #tpu.memory_space<vmem>>) attributes {dimension_semantics = [#tpu.dimension_semantics<parallel>], iteration_bounds = array<i64: 1>, scalar_prefetch = 0 : i64, scratch_operands = 0 : i64, tpu.core_type = #tpu.core_type<tc>, window_params = [{transform_indices = @transform_0, window_bounds = array<i64: 72, 128>}, {pipeline_mode = #tpu.pipeline_mode<synchronous>, transform_indices = @transform_1, window_bounds = array<i64: 128, 72>}, {transform_indices = @transform_2, window_bounds = array<i64: 1, 128>}]} {
    %c0 = arith.constant 0 : index
    %c0_0 = arith.constant 0 : index
    %0 = vector.load %arg2[%c0, %c0_0] : memref<128x72xbf16, #tpu.memory_space<vmem>>, vector<128x72xbf16>
    %c0_1 = arith.constant 0 : index
    %c0_2 = arith.constant 0 : index
    %1 = vector.load %arg1[%c0_1, %c0_2] : memref<72x128xbf16, #tpu.memory_space<vmem>>, vector<72x128xbf16>
    %cst = arith.constant dense<0.000000e+00> : vector<128x128xf32>
    %2 = tpu.matmul %0, %1, %cst {dimension_numbers = #tpu.dot_dimension_numbers<[1], [0], [0], [1], [0, 0, 1, 1], [], []>} : vector<128x72xbf16>, vector<72x128xbf16>, vector<128x128xf32> -> vector<128x128xf32>
    %3 = vector.extract_strided_slice %2 {offsets = [0, 0], sizes = [64, 128], strides = [1, 1]} : vector<128x128xf32> to vector<64x128xf32>
    %4 = vector.extract_strided_slice %2 {offsets = [64, 0], sizes = [64, 128], strides = [1, 1]} : vector<128x128xf32> to vector<64x128xf32>
    %5 = arith.mulf %3, %4 : vector<64x128xf32>
    %cst_3 = arith.constant dense<0.000000e+00> : vector<128xf32>
    %6 = vector.multi_reduction <add>, %5, %cst_3 [0] : vector<64x128xf32> to vector<128xf32>
    %7 = vector.shape_cast %6 : vector<128xf32> to vector<1x128xf32>
    %c0_4 = arith.constant 0 : index
    %c0_5 = arith.constant 0 : index
    %8 = vector.load %arg3[%c0_4, %c0_5] : memref<1x128xf32, #tpu.memory_space<vmem>>, vector<1x128xf32>
    tpu.vector_store %arg3[%c0_4, %c0_5], %7 {strides = array<i32>} : memref<1x128xf32, #tpu.memory_space<vmem>>, vector<1x128xf32>,
    return
  }
  func.func @transform_0(%arg0: i32) -> (i32, i32) {
    %c0_i32 = arith.constant 0 : i32
    %c0_i32_0 = arith.constant 0 : i32
    return %c0_i32, %arg0 : i32, i32
  }
  func.func @transform_1(%arg0: i32) -> (i32, i32) {
    %c0_i32 = arith.constant 0 : i32
    %c0_i32_0 = arith.constant 0 : i32
    %c0_i32_1 = arith.constant 0 : i32
    return %c0_i32, %c0_i32_0 : i32, i32
  }
  func.func @transform_2(%arg0: i32) -> (i32, i32) {
    %c0_i32 = arith.constant 0 : i32
    %c0_i32_0 = arith.constant 0 : i32
    return %c0_i32, %arg0 : i32, i32
  }
}

</mosaic_0001>

<llo_original>
// kernel: two_tower_forward.1
$region0: #{two_tower_forward.1}
  #allocation0 [shape = 'u32[]', space=smem, size = 0x4, offset = 0x4, fixed_abs, tag = 'smem constant byte address 0x4 - core index']
  #allocation1 [shape = 'u32[144,128]{1,0:T(1,128)}', space=vmem, size = 0x12000, scoped, tag = 'internal scratch']
  %s0 = inlined_call_operand.vmem [shape: bf16[72,128], index: 0, kind: input, shape index: {}]
  %s1 = inlined_call_operand.vmem [shape: bf16[128,72], index: 1, kind: input, shape index: {}]
  %s2 = inlined_call_operand.vmem [shape: f32[1,128], index: 2, kind: output, shape index: {}]
  %s3 = sld [smem:[#allocation0]]
  $region18: #{two_tower_forward.1} parent=0
    _
  %s5 = ssub.s32 1, %s3
  %s6 = scalar_select 0, %s5, %s3
  // Predicated region
  $region2: #{two_tower_forward.1} parent=0 // pred_check
    _
  $region3: #{two_tower_forward.1} parent=0 // pred_check_branch
    %8 = sbr.rel (0) target = $region5
  $region4: #{two_tower_forward.1} parent=0 // pred_region
    _
  $region5: #{two_tower_forward.1} parent=0 // pred_fallthru
    _
  // Predicated region
  $region6: #{two_tower_forward.1} parent=0 // pred_check
    _
  $region7: #{two_tower_forward.1} parent=0 // pred_check_branch
    %10 = sbr.rel (0) target = $region9
  $region8: #{two_tower_forward.1} parent=0 // pred_region
    _
  $region9: #{two_tower_forward.1} parent=0 // pred_fallthru
    _
  %v12 = vld [vmem:[%s1] sm:$0xf]
  %v13 = vld [vmem:[%s1 + $0x4] sm:$0xf]
  %v14 = vld [vmem:[%s1 + $0x8] sm:$0xf]
  %v15 = vld [vmem:[%s1 + $0xc] sm:$0xf]
  %v16 = vld [vmem:[%s1 + $0x10] sm:$0xf]
  %v17 = vld [vmem:[%s1 + $0x14] sm:$0xf]
  %v18 = vld [vmem:[%s1 + $0x18] sm:$0xf]
  %v19 = vld [vmem:[%s1 + $0x1c] sm:$0xf]
  %v20 = vld [vmem:[%s1 + $0x20] sm:$0xf]
  %v21 = vld [vmem:[%s1 + $0x24] sm:$0xf]
  %v22 = vld [vmem:[%s1 + $0x28] sm:$0xf]
  %v23 = vld [vmem:[%s1 + $0x2c] sm:$0xf]
  %v24 = vld [vmem:[%s1 + $0x30] sm:$0xf]
  %v25 = vld [vmem:[%s1 + $0x34] sm:$0xf]
  %v26 = vld [vmem:[%s1 + $0x38] sm:$0xf]
  %v27 = vld [vmem:[%s1 + $0x3c] sm:$0xf]
  %v28 = vld [vmem:[%s0] sm:$0xf]
  %v29 = vld [vmem:[%s0 + $0x4] sm:$0xf]
  %v30 = vld [vmem:[%s0 + $0x8] sm:$0xf]
  %v31 = vld [vmem:[%s0 + $0xc] sm:$0xf]
  %v32 = vld [vmem:[%s0 + $0x10] sm:$0xf]
  %v33 = vld [vmem:[%s0 + $0x14] sm:$0xf]
  %v34 = vld [vmem:[%s0 + $0x18] sm:$0xf]
  %v35 = vld [vmem:[%s0 + $0x1c] sm:$0xf]
  %v36 = vld [vmem:[%s0 + $0x20] sm:$0xf]
  %v53 = vunpack.c.l.b16 %v12
  %v54 = vunpack.c.l.b16 %v13
  %v55 = vunpack.c.l.b16 %v14
  %v56 = vunpack.c.l.b16 %v15
  %v57 = vunpack.c.l.b16 %v16
  %v58 = vunpack.c.l.b16 %v17
  %v59 = vunpack.c.l.b16 %v18
  %v60 = vunpack.c.l.b16 %v19
  %v61 = vunpack.c.l.b16 %v20
  %v62 = vunpack.c.l.b16 %v21
  %v63 = vunpack.c.l.b16 %v22
  %v64 = vunpack.c.l.b16 %v23
  %v65 = vunpack.c.l.b16 %v24
  %v66 = vunpack.c.l.b16 %v25
  %v67 = vunpack.c.l.b16 %v26
  %v68 = vunpack.c.l.b16 %v27
  %v69 = vpack.c.b16 %v54, %v53
  %v70 = vpack.c.b16 %v56, %v55
  %v71 = vpack.c.b16 %v58, %v57
  %v72 = vpack.c.b16 %v60, %v59
  %v73 = vpack.c.b16 %v62, %v61
  %v74 = vpack.c.b16 %v64, %v63
  %v75 = vpack.c.b16 %v66, %v65
  %v76 = vpack.c.b16 %v68, %v67
  %v86 = vunpack.c.l.b16 %v28
  %v87 = vunpack.c.l.b16 %v29
  %v88 = vunpack.c.l.b16 %v30
  %v89 = vunpack.c.l.b16 %v31
  %v90 = vunpack.c.l.b16 %v32
  %v91 = vunpack.c.l.b16 %v33
  %v92 = vunpack.c.l.b16 %v34
  %v93 = vunpack.c.l.b16 %v35
  %v94 = vunpack.c.l.b16 %v36
  %v95 = vpack.c.b16 %v87, %v86
  %v96 = vpack.c.b16 %v89, %v88
  %v97 = vpack.c.b16 %v91, %v90
  %v98 = vpack.c.b16 %v93, %v92
  %v99 = vpack.c.b16 %v94, %v94
  %vm104 = vcmask 588800
  %v106 = vsel %vm104, %v69, 0
  %v109 = vsel %vm104, %v70, 0
  %v112 = vsel %vm104, %v71, 0
  %v115 = vsel %vm104, %v72, 0
  %v118 = vsel %vm104, %v73, 0
  %v121 = vsel %vm104, %v74, 0
  %v124 = vsel %vm104, %v75, 0
  %v127 = vsel %vm104, %v76, 0
  %vm129 = vcmask 1043456
  %v131 = vsel %vm129, %v99, 0
  %133 = vmatprep.subr.bf16.mxu0 0
  %134 = vmatpush1.bf16.msra.mxu0 %v95
  %135 = vmatprep.subr.bf16.mxu0 0
  %136 = vmatpush1.bf16.msra.mxu0 %v96
  %137 = vmatprep.subr.bf16.mxu0 0
  %138 = vmatpush1.bf16.msra.mxu0 %v97
  %139 = vmatprep.subr.bf16.mxu0 0
  %140 = vmatpush1.bf16.msra.mxu0 %v98
  %141 = vmatprep.subr.bf16.mxu0 0
  %142 = vmatpush1.bf16.msra.mxu0 %v131
  %143 = vmatprep.subr.bf16.mxu0 0
  %144 = vmatpush1.bf16.msra.mxu0 0
  %145 = vmatprep.subr.bf16.mxu0 0
  %146 = vmatpush1.bf16.msra.mxu0 0
  %147 = vmatprep.subr.bf16.mxu0 0
  %148 = vmatpush1.bf16.msra.mxu0 0
  %149 = vmatprep.subr.bf16.mxu0 0
  %150 = vmatpush1.bf16.msra.mxu0 0
  %151 = vmatprep.subr.bf16.mxu0 0
  %152 = vmatpush1.bf16.msra.mxu0 0
  %153 = vmatprep.subr.bf16.mxu0 0
  %154 = vmatpush1.bf16.msra.mxu0 0
  %155 = vmatprep.subr.bf16.mxu0 0
  %156 = vmatpush1.bf16.msra.mxu0 0
  %157 = vmatprep.subr.bf16.mxu0 0
  %158 = vmatpush1.bf16.msra.mxu0 0
  %159 = vmatprep.subr.bf16.mxu0 0
  %160 = vmatpush1.bf16.msra.mxu0 0
  %161 = vmatprep.subr.bf16.mxu0 0
  %162 = vmatpush1.bf16.msra.mxu0 0
  %163 = vmatprep.subr.bf16.mxu0 0
  %164 = vmatpush1.bf16.msra.mxu0 0
  %165 = vmatprep.mubr.bf16.mxu0 0
  %166 = vmatmul.mubr.bf16.gmra.mrb[0].mxu0 %v106
  %v167 = vpop.f32.mrb[0].mxu0
  %v168 = vadd.f32 0.0, %v167
  %v169 = vpop.f32.mrb[0].mxu0
  %v170 = vpop.f32.mrb[0].mxu0
  %v171 = vadd.f32 0.0, %v170
  %v172 = vpop.f32.mrb[0].mxu0
  %173 = vmatprep.mubr.bf16.mxu0 0
  %174 = vmatmul.mubr.bf16.gmra.mrb[0].mxu0 %v109
  %v175 = vpop.f32.mrb[0].mxu0
  %v176 = vadd.f32 0.0, %v175
  %v177 = vpop.f32.mrb[0].mxu0
  %v178 = vpop.f32.mrb[0].mxu0
  %v179 = vadd.f32 0.0, %v178
  %v180 = vpop.f32.mrb[0].mxu0
  %181 = vmatprep.mubr.bf16.mxu0 0
  %182 = vmatmul.mubr.bf16.gmra.mrb[0].mxu0 %v112
  %v183 = vpop.f32.mrb[0].mxu0
  %v184 = vadd.f32 0.0, %v183
  %v185 = vpop.f32.mrb[0].mxu0
  %v186 = vpop.f32.mrb[0].mxu0
  %v187 = vadd.f32 0.0, %v186
  %v188 = vpop.f32.mrb[0].mxu0
  %189 = vmatprep.mubr.bf16.mxu0 0
  %190 = vmatmul.mubr.bf16.gmra.mrb[0].mxu0 %v115
  %v191 = vpop.f32.mrb[0].mxu0
  %v192 = vadd.f32 0.0, %v191
  %v193 = vpop.f32.mrb[0].mxu0
  %v194 = vpop.f32.mrb[0].mxu0
  %v195 = vadd.f32 0.0, %v194
  %v196 = vpop.f32.mrb[0].mxu0
  %197 = vmatprep.mubr.bf16.mxu0 0
  %198 = vmatmul.mubr.bf16.gmra.mrb[0].mxu0 %v118
  %v199 = vpop.f32.mrb[0].mxu0
  %v200 = vadd.f32 0.0, %v199
  %v201 = vpop.f32.mrb[0].mxu0
  %v202 = vpop.f32.mrb[0].mxu0
  %v203 = vadd.f32 0.0, %v202
  %v204 = vpop.f32.mrb[0].mxu0
  %205 = vmatprep.mubr.bf16.mxu0 0
  %206 = vmatmul.mubr.bf16.gmra.mrb[0].mxu0 %v121
  %v207 = vpop.f32.mrb[0].mxu0
  %v208 = vadd.f32 0.0, %v207
  %v209 = vpop.f32.mrb[0].mxu0
  %v210 = vpop.f32.mrb[0].mxu0
  %v211 = vadd.f32 0.0, %v210
  %v212 = vpop.f32.mrb[0].mxu0
  %213 = vmatprep.mubr.bf16.mxu0 0
  %214 = vmatmul.mubr.bf16.gmra.mrb[0].mxu0 %v124
  %v215 = vpop.f32.mrb[0].mxu0
  %v216 = vadd.f32 0.0, %v215
  %v217 = vpop.f32.mrb[0].mxu0
  %v218 = vpop.f32.mrb[0].mxu0
  %v219 = vadd.f32 0.0, %v218
  %v220 = vpop.f32.mrb[0].mxu0
  %221 = vmatprep.mubr.bf16.mxu0 0
  %222 = vmatmul.mubr.bf16.gmra.mrb[0].mxu0 %v127
  %v223 = vpop.f32.mrb[0].mxu0
  %v224 = vadd.f32 0.0, %v223
  %v225 = vpop.f32.mrb[0].mxu0
  %v226 = vpop.f32.mrb[0].mxu0
  %v227 = vadd.f32 0.0, %v226
  %v228 = vpop.f32.mrb[0].mxu0
  %229 = vdwg.mxu0
  %v230 = vmul.f32 %v168, %v200
  %v231 = vmul.f32 %v171, %v203
  %v232 = vmul.f32 %v176, %v208
  %v233 = vmul.f32 %v179, %v211
  %v234 = vmul.f32 %v184, %v216
  %v235 = vmul.f32 %v187, %v219
  %v236 = vmul.f32 %v192, %v224
  %v237 = vmul.f32 %v195, %v227
  %v238 = vadd.f32 %v230, %v231
  %v239 = vadd.f32 %v238, %v232
  %v240 = vadd.f32 %v239, %v233
  %v241 = vadd.f32 %v240, %v234
  %v242 = vadd.f32 %v241, %v235
  %v243 = vadd.f32 %v242, %v236
  %v244 = vadd.f32 %v243, %v237
  %v245 = vrot.slane %v244, 4
  %v246 = vadd.f32 %v244, %v245
  %v247 = vrot.slane %v246, 2
  %v248 = vadd.f32 %v246, %v247
  %v249 = vrot.slane %v248, 1
  %v250 = vadd.f32 %v248, %v249
  %251 = vst [vmem:[%s2] sm:$0x1] %v250
  // Predicated region
  $region10: #{two_tower_forward.1} parent=0 // pred_check
    _
  $region11: #{two_tower_forward.1} parent=0 // pred_check_branch
    %253 = sbr.rel (0) target = $region13
  $region12: #{two_tower_forward.1} parent=0 // pred_region
    _
  $region13: #{two_tower_forward.1} parent=0 // pred_fallthru
    _
  // Predicated region
  $region14: #{two_tower_forward.1} parent=0 // pred_check
    _
  $region15: #{two_tower_forward.1} parent=0 // pred_check_branch
    %255 = sbr.rel (0) target = $region17
  $region16: #{two_tower_forward.1} parent=0 // pred_region
    _
  $region17: #{two_tower_forward.1} parent=0 // pred_fallthru
    _

</llo_original>
